<compile_context>
chip_gen: v5e
topology: v5e:2x2
jax: 0.10.0
libtpu: 0.0.40
codegen_flags: <defaults>
</compile_context>

<pallas_src>
import functools

import jax
import jax.numpy as jnp
from jax.experimental import pallas as pl
from jax.experimental.pallas import tpu as pltpu

_LANE = 128
_VMEM_BUDGET = 40 * 1024 * 1024           # target working set
_VMEM_LIMIT = 48 * 1024 * 1024            # scoped VMEM limit passed to Mosaic
_WEIGHT_RESIDENT_BYTES = 24 * 1024 * 1024 # bf16 W1+W2 (double-buffer-safe) residency cutoff


def _round_up(x, m):
    return ((x + m - 1) // m) * m


def _cdiv(a, b):
    return (a + b - 1) // b


def _gelu_exact(x):
    # nn.GELU() default is the exact erf formulation; computed in f32.
    # TODO(synk): on v6e/v7x a bf16 bias+GELU chain would roughly halve VALU/EUP
    # work once MXU-bound; kept in f32 for exact erf parity and v5e friendliness.
    return 0.5 * x * (1.0 + jax.lax.erf(x * jnp.float32(0.7071067811865476)))


# --------------------------------------------------------------------------- #
# Kernels
# --------------------------------------------------------------------------- #
def _ffn_kernel_resident(x_ref, w1_ref, b1_ref, w2_ref, b2_ref, o_ref):
    # Single-pass, weight-resident path (1-D grid over row tiles).
    # x_ref:  (tm, dp)  row tile (f32 or bf16; cast to bf16 here)
    # w1_ref: (dp, hp)  full padded W1 (bf16, resident)
    # b1_ref: (1, hp)   full padded b1 (f32)
    # w2_ref: (hp, op)  full padded W2 (bf16, resident)
    # b2_ref: (1, op)   full padded b2 (f32)
    # o_ref:  (tm, op)
    x = x_ref[...].astype(w1_ref.dtype)
    h = jnp.dot(x, w1_ref[...], preferred_element_type=jnp.float32)
    h = _gelu_exact(h + b1_ref[...])
    # TODO(synk): training-mode dropout (RNG mask) not implemented; identity at eval.
    y = jnp.dot(h.astype(w2_ref.dtype), w2_ref[...],
                preferred_element_type=jnp.float32)
    o_ref[...] = (y + b2_ref[...]).astype(o_ref.dtype)


def _ffn_kernel_split(x_ref, w1_ref, b1_ref, w2_ref, b2_ref, o_ref, acc_ref):
    # Hidden-split path (2-D grid: row tiles x hidden tiles; h is the reduction).
    h_idx = pl.program_id(1)

    @pl.when(h_idx == 0)
    def _():
        acc_ref[...] = jnp.zeros_like(acc_ref)

    x = x_ref[...].astype(w1_ref.dtype)
    h = jnp.dot(x, w1_ref[...], preferred_element_type=jnp.float32)
    h = _gelu_exact(h + b1_ref[...])
    acc_ref[...] += jnp.dot(h.astype(w2_ref.dtype), w2_ref[...],
                            preferred_element_type=jnp.float32)

    @pl.when(h_idx == pl.num_programs(1) - 1)
    def _():
        o_ref[...] = (acc_ref[...] + b2_ref[...]).astype(o_ref.dtype)


# --------------------------------------------------------------------------- #
# Host-side wrappers
# --------------------------------------------------------------------------- #
def prepare_ffn_params(w1, b1, w2, b2):
    """One-time pad + bf16 cast of the FFN weights (hoisted out of the hot path).

    w1: (dim, hidden)   b1: (hidden,)   w2: (hidden, out_dim)   b2: (out_dim,)
    Zero-padding of feature dims is semantically exact (zero rows/cols contribute 0).
    """
    dim, hidden = w1.shape
    out_dim = w2.shape[1]
    dp = _round_up(dim, _LANE)
    op = _round_up(out_dim, _LANE)
    hp = _round_up(hidden, _LANE)
    # If the padded bf16 weights are too big to stay VMEM-resident, the kernel
    # splits the hidden axis with th=512; pad hp so 512 divides it.
    if (dp * hp + hp * op) * 2 * 2 > _WEIGHT_RESIDENT_BYTES:
        hp = _round_up(hidden, 512)

    w1p = jnp.pad(w1, ((0, dp - dim), (0, hp - hidden))).astype(jnp.bfloat16)
    b1p = jnp.pad(b1.reshape(1, hidden).astype(jnp.float32),
                  ((0, 0), (0, hp - hidden)))
    w2p = jnp.pad(w2, ((0, hp - hidden), (0, op - out_dim))).astype(jnp.bfloat16)
    b2p = jnp.pad(b2.reshape(1, out_dim).astype(jnp.float32),
                  ((0, 0), (0, op - out_dim)))
    return {"w1": w1p, "b1": b1p, "w2": w2p, "b2": b2p, "out_dim": out_dim}


def _single_pass_bytes(tm, dp, hp, op, x_bytes, out_bytes):
    weights = (dp * hp + hp * op) * 2 * 2   # bf16, assume double-buffered
    x_tile = tm * dp * x_bytes * 2
    o_tile = tm * op * out_bytes * 2
    gelu_tmp = tm * hp * (4 + 2)            # f32 intermediate + bf16 copy
    return weights + x_tile + o_tile + gelu_tmp


def _split_pass_bytes(tm, dp, th, op, x_bytes, out_bytes):
    x_tile = tm * dp * x_bytes * 2
    w_tiles = (dp * th + th * op) * 2 * 2
    o_tile = tm * op * out_bytes * 2
    acc = tm * op * 4
    gelu_tmp = tm * th * (4 + 2)
    return x_tile + w_tiles + o_tile + acc + gelu_tmp


@functools.partial(jax.jit, static_argnames=("out_dim", "tm"))
def feed_forward(x, w1p, b1p, w2p, b2p, out_dim, tm=1024):
    """x: (B, N, dim) -> (B, N, out_dim); weights pre-padded via prepare_ffn_params."""
    B, N, dim = x.shape
    dp, hp = w1p.shape
    op = w2p.shape[1]
    M = B * N
    out_bytes = jnp.dtype(x.dtype).itemsize
    x_bytes = 4  # worst case (f32 x tile when the pre-pass cast is skipped)

    # ---- Row-tile candidates: big for arithmetic intensity, clamped for small
    # ---- M, capped so there are >=2 row tiles for the two v7x TensorCores. ----
    if M <= 256:
        cands = [_round_up(max(M, 1), 8)]
    else:
        tm_top = min(_round_up(tm, 256), _round_up(M, 256))
        tm_top = max(256, min(tm_top, _round_up(_cdiv(M, 2), 256)))
        cands, t = [], tm_top
        while True:
            cands.append(t)
            if t <= 256:
                break
            t = max(256, _round_up(t // 2, 256))

    # ---- Path selection: weight-resident single pass if it fits VMEM, else
    # ---- hidden split with an f32 accumulator. ----
    tm_eff, single_pass, th = None, True, hp
    for t in cands:
        if _single_pass_bytes(t, dp, hp, op, x_bytes, out_bytes) <= _VMEM_BUDGET:
            tm_eff = t
            break
    if tm_eff is None:
        single_pass = False
        th = 512 if hp % 512 == 0 else (256 if hp % 256 == 0 else 128)
        for t in cands:
            if _split_pass_bytes(t, dp, th, op, x_bytes, out_bytes) <= _VMEM_BUDGET:
                tm_eff = t
                break
        if tm_eff is None:
            tm_eff = cands[-1]

    M_pad = _round_up(M, tm_eff)

    # ---- x: skip the pad/cast HBM pre-pass when the layout already matches;
    # ---- the in-kernel bf16 cast is cheap VPU work hidden under the MXU. ----
    if dim == dp and M_pad == M:
        x2 = x.reshape(M, dim)
    else:
        x2 = jnp.pad(x.reshape(M, dim),
                     ((0, M_pad - M), (0, dp - dim))).astype(jnp.bfloat16)

    cost = pl.CostEstimate(
        flops=2 * M_pad * hp * (dp + op),
        transcendentals=M_pad * hp,
        bytes_accessed=(x2.size * x2.dtype.itemsize
                        + (w1p.size + w2p.size) * 2
                        + (b1p.size + b2p.size) * 4
                        + M_pad * op * out_bytes),
    )

    if single_pass:
        out = pl.pallas_call(
            _ffn_kernel_resident,
            out_shape=jax.ShapeDtypeStruct((M_pad, op), x.dtype),
            grid_spec=pltpu.PrefetchScalarGridSpec(
                num_scalar_prefetch=0,
                grid=(M_pad // tm_eff,),
                in_specs=[
                    pl.BlockSpec((tm_eff, dp), lambda i: (i, 0)),
                    pl.BlockSpec((dp, hp), lambda i: (0, 0)),   # resident
                    pl.BlockSpec((1, hp), lambda i: (0, 0)),    # resident
                    pl.BlockSpec((hp, op), lambda i: (0, 0)),   # resident
                    pl.BlockSpec((1, op), lambda i: (0, 0)),    # resident
                ],
                out_specs=pl.BlockSpec((tm_eff, op), lambda i: (i, 0)),
            ),
            compiler_params=pltpu.CompilerParams(
                dimension_semantics=("parallel",),
                vmem_limit_bytes=_VMEM_LIMIT,
            ),
            cost_estimate=cost,
        )(x2, w1p, b1p, w2p, b2p)
    else:
        out = pl.pallas_call(
            _ffn_kernel_split,
            out_shape=jax.ShapeDtypeStruct((M_pad, op), x.dtype),
            grid_spec=pltpu.PrefetchScalarGridSpec(
                num_scalar_prefetch=0,
                grid=(M_pad // tm_eff, hp // th),
                in_specs=[
                    pl.BlockSpec((tm_eff, dp), lambda i, h: (i, 0)),
                    pl.BlockSpec((dp, th), lambda i, h: (0, h)),
                    pl.BlockSpec((1, th), lambda i, h: (0, h)),
                    pl.BlockSpec((th, op), lambda i, h: (h, 0)),
                    pl.BlockSpec((1, op), lambda i, h: (0, 0)),
                ],
                out_specs=pl.BlockSpec((tm_eff, op), lambda i, h: (i, 0)),
                scratch_shapes=[pltpu.VMEM((tm_eff, op), jnp.float32)],
            ),
            compiler_params=pltpu.CompilerParams(
                dimension_semantics=("parallel", "arbitrary"),
                vmem_limit_bytes=_VMEM_LIMIT,
            ),
            cost_estimate=cost,
        )(x2, w1p, b1p, w2p, b2p)

    return out[:M, :out_dim].reshape(B, N, out_dim)


def feed_forward_ref(x, w1, b1, w2, b2):
    h = jnp.einsum("bnd,dh->bnh", x, w1) + b1
    h = 0.5 * h * (1.0 + jax.lax.erf(h / jnp.sqrt(2.0)))
    return jnp.einsum("bnh,ho->bno", h, w2) + b2


if __name__ == "__main__":
    # Small shapes consistent with the module: dim=32, hidden_dim=64, out_dim=dim.
    B, N, dim, hidden_dim = 2, 8, 32, 64
    out_dim = dim

    key = jax.random.PRNGKey(0)
    kx, k1, kb1, k2, kb2 = jax.random.split(key, 5)

    x = jax.random.normal(kx, (B, N, dim), dtype=jnp.float32)
    # Deterministic param init (roughly PyTorch Linear's uniform fan-in scheme).
    w1 = jax.random.uniform(k1, (dim, hidden_dim), jnp.float32,
                            -1.0 / jnp.sqrt(dim), 1.0 / jnp.sqrt(dim))
    b1 = jax.random.uniform(kb1, (hidden_dim,), jnp.float32,
                            -1.0 / jnp.sqrt(dim), 1.0 / jnp.sqrt(dim))
    w2 = jax.random.uniform(k2, (hidden_dim, out_dim), jnp.float32,
                            -1.0 / jnp.sqrt(hidden_dim), 1.0 / jnp.sqrt(hidden_dim))
    b2 = jax.random.uniform(kb2, (out_dim,), jnp.float32,
                            -1.0 / jnp.sqrt(hidden_dim), 1.0 / jnp.sqrt(hidden_dim))

    # One-time weight preparation (pad + bf16 cast), hoisted out of the hot path.
    params = prepare_ffn_params(w1, b1, w2, b2)

    y = feed_forward(x, params["w1"], params["b1"], params["w2"], params["b2"],
                     out_dim=params["out_dim"])
    jax.block_until_ready(y)

    y_ref = feed_forward_ref(x, w1, b1, w2, b2)
    assert y.shape == (B, N, out_dim)
    # bf16 matmul inputs (f32 accumulation) -> tolerance loosened vs pure-f32 ref.
    assert jnp.allclose(y, y_ref, atol=5e-2, rtol=5e-2), "mismatch vs reference"
    print("KERNEL_OK")
</pallas_src>

<mosaic_0001>
module attributes {stable_mosaic.version = 11 : i64} {
  func.func @_ffn_kernel_resident(%arg0: i32, %arg1: memref<16x128xbf16, #tpu.memory_space<vmem>>, %arg2: memref<128x128xbf16, #tpu.memory_space<vmem>>, %arg3: memref<1x128xf32, #tpu.memory_space<vmem>>, %arg4: memref<128x128xbf16, #tpu.memory_space<vmem>>, %arg5: memref<1x128xf32, #tpu.memory_space<vmem>>, %arg6: memref<16x128xf32, #tpu.memory_space<vmem>>) attributes {dimension_semantics = [#tpu.dimension_semantics<parallel>], iteration_bounds = array<i64: 1>, scalar_prefetch = 0 : i64, scratch_operands = 0 : i64, tpu.core_type = #tpu.core_type<tc>, window_params = [{transform_indices = @transform_0, window_bounds = array<i64: 16, 128>}, {pipeline_mode = #tpu.pipeline_mode<synchronous>, transform_indices = @transform_1, window_bounds = array<i64: 128, 128>}, {pipeline_mode = #tpu.pipeline_mode<synchronous>, transform_indices = @transform_2, window_bounds = array<i64: 1, 128>}, {pipeline_mode = #tpu.pipeline_mode<synchronous>, transform_indices = @transform_3, window_bounds = array<i64: 128, 128>}, {pipeline_mode = #tpu.pipeline_mode<synchronous>, transform_indices = @transform_4, window_bounds = array<i64: 1, 128>}, {transform_indices = @transform_5, window_bounds = array<i64: 16, 128>}]} {
    %c0 = arith.constant 0 : index
    %c0_0 = arith.constant 0 : index
    %0 = vector.load %arg1[%c0, %c0_0] : memref<16x128xbf16, #tpu.memory_space<vmem>>, vector<16x128xbf16>
    %c0_1 = arith.constant 0 : index
    %c0_2 = arith.constant 0 : index
    %1 = vector.load %arg2[%c0_1, %c0_2] : memref<128x128xbf16, #tpu.memory_space<vmem>>, vector<128x128xbf16>
    %cst = arith.constant dense<0.000000e+00> : vector<16x128xf32>
    %2 = tpu.matmul %0, %1, %cst {dimension_numbers = #tpu.dot_dimension_numbers<[1], [0], [0], [1], [0, 0, 1, 1], [], []>} : vector<16x128xbf16>, vector<128x128xbf16>, vector<16x128xf32> -> vector<16x128xf32>
    %c0_3 = arith.constant 0 : index
    %c0_4 = arith.constant 0 : index
    %3 = vector.load %arg3[%c0_3, %c0_4] : memref<1x128xf32, #tpu.memory_space<vmem>>, vector<1x128xf32>
    %4 = vector.broadcast %3 : vector<1x128xf32> to vector<16x128xf32>
    %5 = arith.addf %2, %4 : vector<16x128xf32>
    %cst_5 = arith.constant 5.000000e-01 : f32
    %6 = vector.broadcast %cst_5 : f32 to vector<16x128xf32>
    %7 = arith.mulf %6, %5 : vector<16x128xf32>
    %cst_6 = arith.constant 0.707106769 : f32
    %8 = vector.broadcast %cst_6 : f32 to vector<16x128xf32>
    %9 = arith.mulf %5, %8 : vector<16x128xf32>
    %10 = math.erf %9 : vector<16x128xf32>
    %cst_7 = arith.constant 1.000000e+00 : f32
    %11 = vector.broadcast %cst_7 : f32 to vector<16x128xf32>
    %12 = arith.addf %11, %10 : vector<16x128xf32>
    %13 = arith.mulf %7, %12 : vector<16x128xf32>
    %14 = arith.truncf %13 : vector<16x128xf32> to vector<16x128xbf16>
    %c0_8 = arith.constant 0 : index
    %c0_9 = arith.constant 0 : index
    %15 = vector.load %arg4[%c0_8, %c0_9] : memref<128x128xbf16, #tpu.memory_space<vmem>>, vector<128x128xbf16>
    %cst_10 = arith.constant dense<0.000000e+00> : vector<16x128xf32>
    %16 = tpu.matmul %14, %15, %cst_10 {dimension_numbers = #tpu.dot_dimension_numbers<[1], [0], [0], [1], [0, 0, 1, 1], [], []>} : vector<16x128xbf16>, vector<128x128xbf16>, vector<16x128xf32> -> vector<16x128xf32>
    %c0_11 = arith.constant 0 : index
    %c0_12 = arith.constant 0 : index
    %17 = vector.load %arg5[%c0_11, %c0_12] : memref<1x128xf32, #tpu.memory_space<vmem>>, vector<1x128xf32>
    %18 = vector.broadcast %17 : vector<1x128xf32> to vector<16x128xf32>
    %19 = arith.addf %16, %18 : vector<16x128xf32>
    %c0_13 = arith.constant 0 : index
    %c0_14 = arith.constant 0 : index
    %20 = vector.load %arg6[%c0_13, %c0_14] : memref<16x128xf32, #tpu.memory_space<vmem>>, vector<16x128xf32>
    tpu.vector_store %arg6[%c0_13, %c0_14], %19 {strides = array<i32>} : memref<16x128xf32, #tpu.memory_space<vmem>>, vector<16x128xf32>,
    return
  }
  func.func @transform_0(%arg0: i32) -> (i32, i32) {
    %c0_i32 = arith.constant 0 : i32
    %c0_i32_0 = arith.constant 0 : i32
    return %arg0, %c0_i32 : i32, i32
  }
  func.func @transform_1(%arg0: i32) -> (i32, i32) {
    %c0_i32 = arith.constant 0 : i32
    %c0_i32_0 = arith.constant 0 : i32
    %c0_i32_1 = arith.constant 0 : i32
    return %c0_i32, %c0_i32_0 : i32, i32
  }
  func.func @transform_2(%arg0: i32) -> (i32, i32) {
    %c0_i32 = arith.constant 0 : i32
    %c0_i32_0 = arith.constant 0 : i32
    %c0_i32_1 = arith.constant 0 : i32
    return %c0_i32, %c0_i32_0 : i32, i32
  }
  func.func @transform_3(%arg0: i32) -> (i32, i32) {
    %c0_i32 = arith.constant 0 : i32
    %c0_i32_0 = arith.constant 0 : i32
    %c0_i32_1 = arith.constant 0 : i32
    return %c0_i32, %c0_i32_0 : i32, i32
  }
  func.func @transform_4(%arg0: i32) -> (i32, i32) {
    %c0_i32 = arith.constant 0 : i32
    %c0_i32_0 = arith.constant 0 : i32
    %c0_i32_1 = arith.constant 0 : i32
    return %c0_i32, %c0_i32_0 : i32, i32
  }
  func.func @transform_5(%arg0: i32) -> (i32, i32) {
    %c0_i32 = arith.constant 0 : i32
    %c0_i32_0 = arith.constant 0 : i32
    return %arg0, %c0_i32 : i32, i32
  }
}

</mosaic_0001>

<llo_original>
// kernel: feed_forward.1
$region0: #{feed_forward.1}
  #allocation0 [shape = 'u32[]', space=smem, size = 0x4, offset = 0x4, fixed_abs, tag = 'smem constant byte address 0x4 - core index']
  #allocation1 [shape = 'u32[72,128]{1,0:T(1,128)}', space=vmem, size = 0x9000, scoped, tag = 'internal scratch']
  %s0 = inlined_call_operand.vmem [shape: bf16[16,128], index: 0, kind: input, shape index: {}]
  %s1 = inlined_call_operand.hbm [shape: bf16[128,128], index: 1, kind: input, shape index: {}]
  %s2 = inlined_call_operand.vmem [shape: f32[1,128], index: 2, kind: input, shape index: {}]
  %s3 = inlined_call_operand.hbm [shape: bf16[128,128], index: 3, kind: input, shape index: {}]
  %s4 = inlined_call_operand.vmem [shape: f32[1,128], index: 4, kind: input, shape index: {}]
  %s5 = inlined_call_operand.vmem [shape: f32[16,128], index: 5, kind: output, shape index: {}]
  %s6 = sld [smem:[#allocation0]]
  $region38: #{feed_forward.1} parent=0
    _
  %s8 = ssub.s32 1, %s6
  %s9 = scalar_select 0, %s8, %s6
  $region1: #{feed_forward.1} parent=0
    #allocation2 [shape = 'u8[32768]{0}', space=vmem, size = 0x8000, scoped, tag = 'input window, operand 1, single buffered']
    #allocation3 [shape = 's32[1]{0}', space=sflag, size = 0x4, scoped, tag = 'scoped memory for feed_forward.1']
    #allocation4 [shape = 'u8[32768]{0}', space=vmem, size = 0x8000, scoped, tag = 'input window, operand 3, single buffered']
    #allocation5 [shape = 's32[1]{0}', space=sflag, size = 0x4, scoped, tag = 'scoped memory for feed_forward.1']
    %10 = vsyncpa [#allocation3], 0
    %11 = vsyncpa [#allocation5], 0
    // Predicated region
    $region2: #{feed_forward.1} parent=1 // pred_check
      _
    $region3: #{feed_forward.1} parent=1 // pred_check_branch
      %13 = sbr.rel (0) target = $region5
    $region4: #{feed_forward.1} parent=1 // pred_region
      _
    $region5: #{feed_forward.1} parent=1 // pred_fallthru
      _
    // Predicated region
    $region6: #{feed_forward.1} parent=1 // pred_check
      _
    $region7: #{feed_forward.1} parent=1 // pred_check_branch
      %15 = sbr.rel (0) target = $region9
    $region8: #{feed_forward.1} parent=1 // pred_region
      %17 = vsyncadd [#allocation3], 0
      %s18 = sshll.u32 %s1, 4
      %s19 = int_to_ptr.hbm [resolvable:$true] %s18
      %s20 = sshll.u32 [#allocation2], 4
      %s21 = int_to_ptr.vmem [resolvable:$true] %s20
      %26 = dma.hbm_to_vmem [thread:$0]  %s19, 1024, %s21, [#allocation3], 64, 64, 4
    $region9: #{feed_forward.1} parent=1 // pred_fallthru
      _
    // Predicated region
    $region10: #{feed_forward.1} parent=1 // pred_check
      _
    $region11: #{feed_forward.1} parent=1 // pred_check_branch
      %28 = sbr.rel (0) target = $region13
    $region12: #{feed_forward.1} parent=1 // pred_region
      _
    $region13: #{feed_forward.1} parent=1 // pred_fallthru
      _
    // Predicated region
    $region14: #{feed_forward.1} parent=1 // pred_check
      _
    $region15: #{feed_forward.1} parent=1 // pred_check_branch
      %30 = sbr.rel (0) target = $region17
    $region16: #{feed_forward.1} parent=1 // pred_region
      %32 = vsyncadd [#allocation5], 0
      %s33 = sshll.u32 %s3, 4
      %s34 = int_to_ptr.hbm [resolvable:$true] %s33
      %s35 = sshll.u32 [#allocation4], 4
      %s36 = int_to_ptr.vmem [resolvable:$true] %s35
      %41 = dma.hbm_to_vmem [thread:$0]  %s34, 1024, %s36, [#allocation5], 64, 64, 4
    $region17: #{feed_forward.1} parent=1 // pred_fallthru
      _
    // Predicated region
    $region18: #{feed_forward.1} parent=1 // pred_check
      _
    $region19: #{feed_forward.1} parent=1 // pred_check_branch
      %43 = sbr.rel (0) target = $region21
    $region20: #{feed_forward.1} parent=1 // pred_region
      _
    $region21: #{feed_forward.1} parent=1 // pred_fallthru
      _
    // Predicated region
    $region22: #{feed_forward.1} parent=1 // pred_check
      _
    $region23: #{feed_forward.1} parent=1 // pred_check_branch
      %45 = sbr.rel (0) target = $region25
    $region24: #{feed_forward.1} parent=1 // pred_region
      %47 = dma.done [#allocation3], 1024
    $region25: #{feed_forward.1} parent=1 // pred_fallthru
      _
    // Predicated region
    $region26: #{feed_forward.1} parent=1 // pred_check
      _
    $region27: #{feed_forward.1} parent=1 // pred_check_branch
      %49 = sbr.rel (0) target = $region29
    $region28: #{feed_forward.1} parent=1 // pred_region
      %51 = dma.done [#allocation5], 1024
    $region29: #{feed_forward.1} parent=1 // pred_fallthru
      _
    %v52 = vld [vmem:[%s0] sm:$0xf]
    %v53 = vld [vmem:[%s0 + $0x4] sm:$0xf]
    %v54 = vld [vmem:[#allocation2] sm:$0xf]
    %v55 = vld [vmem:[#allocation2 + $0x4] sm:$0xf]
    %v56 = vld [vmem:[#allocation2 + $0x8] sm:$0xf]
    %v57 = vld [vmem:[#allocation2 + $0xc] sm:$0xf]
    %v58 = vld [vmem:[#allocation2 + $0x10] sm:$0xf]
    %v59 = vld [vmem:[#allocation2 + $0x14] sm:$0xf]
    %v60 = vld [vmem:[#allocation2 + $0x18] sm:$0xf]
    %v61 = vld [vmem:[#allocation2 + $0x1c] sm:$0xf]
    %v62 = vld [vmem:[#allocation2 + $0x20] sm:$0xf]
    %v63 = vld [vmem:[#allocation2 + $0x24] sm:$0xf]
    %v64 = vld [vmem:[#allocation2 + $0x28] sm:$0xf]
    %v65 = vld [vmem:[#allocation2 + $0x2c] sm:$0xf]
    %v66 = vld [vmem:[#allocation2 + $0x30] sm:$0xf]
    %v67 = vld [vmem:[#allocation2 + $0x34] sm:$0xf]
    %v68 = vld [vmem:[#allocation2 + $0x38] sm:$0xf]
    %v69 = vld [vmem:[#allocation2 + $0x3c] sm:$0xf]
    %v70 = vld [vmem:[%s2] sm:$0x1]
    %v72 = vperm.slane %v70, 0
    %v76 = vunpack.c.l.b16 %v52
    %v77 = vunpack.c.l.b16 %v53
    %v78 = vpack.c.b16 %v77, %v76
    %v96 = vunpack.c.l.b16 %v54
    %v97 = vunpack.c.l.b16 %v55
    %v98 = vunpack.c.l.b16 %v56
    %v99 = vunpack.c.l.b16 %v57
    %v100 = vunpack.c.l.b16 %v58
    %v101 = vunpack.c.l.b16 %v59
    %v102 = vunpack.c.l.b16 %v60
    %v103 = vunpack.c.l.b16 %v61
    %v104 = vunpack.c.l.b16 %v62
    %v105 = vunpack.c.l.b16 %v63
    %v106 = vunpack.c.l.b16 %v64
    %v107 = vunpack.c.l.b16 %v65
    %v108 = vunpack.c.l.b16 %v66
    %v109 = vunpack.c.l.b16 %v67
    %v110 = vunpack.c.l.b16 %v68
    %v111 = vunpack.c.l.b16 %v69
    %v112 = vpack.c.b16 %v97, %v96
    %v113 = vpack.c.b16 %v99, %v98
    %v114 = vpack.c.b16 %v101, %v100
    %v115 = vpack.c.b16 %v103, %v102
    %v116 = vpack.c.b16 %v105, %v104
    %v117 = vpack.c.b16 %v107, %v106
    %v118 = vpack.c.b16 %v109, %v108
    %v119 = vpack.c.b16 %v111, %v110
    %128 = vmatpush.bf16.msra.mxu0 %v119
    %129 = vmatpush.bf16.msra.mxu0 %v118
    %130 = vmatpush.bf16.msra.mxu0 %v117
    %131 = vmatpush.bf16.msra.mxu0 %v116
    %132 = vmatpush.bf16.msra.mxu0 %v115
    %133 = vmatpush.bf16.msra.mxu0 %v114
    %134 = vmatpush.bf16.msra.mxu0 %v113
    %135 = vmatpush.bf16.msra.mxu0 %v112
    %136 = vmatmul.bf16.gmra.mxu0 %v78
    %v137 = vpop.f32.mrf.mxu0
    %v138 = vadd.f32 %v72, %v137
    %v139 = vpop.f32.mrf.mxu0
    %v140 = vadd.f32 %v72, %v139
    %141 = vdwg.mxu0
    %v142 = vmul.f32 %v138, 0.5
    %v143 = vmul.f32 %v140, 0.5
    %v144 = vmul.f32 %v138, 0.70710677
    %v145 = vmul.f32 %v140, 0.70710677
    %v146 = vmul.f32 %v144, %v144
    %v147 = vmin.f32 16.0, %v146
    %v148 = vmul.f32 %v147, 2.1237322e-06
    %v149 = vadd.f32 %v148, 0.00028619796
    %v150 = vmul.f32 %v147, %v149
    %v151 = vadd.f32 %v150, 0.0036580483
    %v152 = vmul.f32 %v147, %v151
    %v153 = vadd.f32 %v152, 0.05243302
    %v154 = vmul.f32 %v147, %v153
    %v155 = vadd.f32 %v154, 0.18741608
    %v156 = vmul.f32 %v147, %v155
    %v157 = vadd.f32 %v156, 1.1283791
    %v158 = vmul.f32 %v144, %v157
    %v159 = vmul.f32 %v147, 3.8918573e-05
    %v160 = vadd.f32 %v159, 0.001143296
    %v161 = vmul.f32 %v147, %v160
    %v162 = vadd.f32 %v161, 0.014752088
    %v163 = vmul.f32 %v147, %v162
    %v164 = vadd.f32 %v163, 0.112945676
    %v165 = vmul.f32 %v147, %v164
    %v166 = vadd.f32 %v165, 0.4994258
    %v167 = vmul.f32 %v147, %v166
    %v168 = vadd.f32 %v167, 1.0
    %v169 = vrcp.pop %v168
    %v170 = vmul.f32 %v168, %v169
    %v171 = vsub.f32 1.0, %v170
    %v172 = vmul.f32 %v169, %v171
    %v173 = vadd.f32 %v169, %v172
    %vm174 = vweird.f32 %v168
    %vm175 = vweird.f32 %v169
    %vm176 = vmor %vm174, %vm175
    %v177 = vsel %vm176, %v169, %v173
    %v178 = vand.u32 2147483647, %v168
    %vm179 = vcmp.eq.f32.partialorder %v178, 8.507059e+37
    %v180 = vand.u32 %v168, 2147483648
    %v181 = vor.u32 1.1754944e-38, %v180
    %v182 = vsel %vm179, %v181, %v177
    %v183 = vmul.f32 %v158, %v182
    %v184 = vmin.f32 %v183, 1.0
    %v185 = vmax.f32 %v184, -1.0
    %v186 = vmul.f32 %v145, %v145
    %v187 = vmin.f32 16.0, %v186
    %v188 = vmul.f32 %v187, 2.1237322e-06
    %v189 = vadd.f32 %v188, 0.00028619796
    %v190 = vmul.f32 %v187, %v189
    %v191 = vadd.f32 %v190, 0.0036580483
    %v192 = vmul.f32 %v187, %v191
    %v193 = vadd.f32 %v192, 0.05243302
    %v194 = vmul.f32 %v187, %v193
    %v195 = vadd.f32 %v194, 0.18741608
    %v196 = vmul.f32 %v187, %v195
    %v197 = vadd.f32 %v196, 1.1283791
    %v198 = vmul.f32 %v145, %v197
    %v199 = vmul.f32 %v187, 3.8918573e-05
    %v200 = vadd.f32 %v199, 0.001143296
    %v201 = vmul.f32 %v187, %v200
    %v202 = vadd.f32 %v201, 0.014752088
    %v203 = vmul.f32 %v187, %v202
    %v204 = vadd.f32 %v203, 0.112945676
    %v205 = vmul.f32 %v187, %v204
    %v206 = vadd.f32 %v205, 0.4994258
    %v207 = vmul.f32 %v187, %v206
    %v208 = vadd.f32 %v207, 1.0
    %v209 = vrcp.pop %v208
    %v210 = vmul.f32 %v208, %v209
    %v211 = vsub.f32 1.0, %v210
    %v212 = vmul.f32 %v209, %v211
    %v213 = vadd.f32 %v209, %v212
    %vm214 = vweird.f32 %v208
    %vm215 = vweird.f32 %v209
    %vm216 = vmor %vm214, %vm215
    %v217 = vsel %vm216, %v209, %v213
    %v218 = vand.u32 2147483647, %v208
    %vm219 = vcmp.eq.f32.partialorder %v218, 8.507059e+37
    %v220 = vand.u32 %v208, 2147483648
    %v221 = vor.u32 1.1754944e-38, %v220
    %v222 = vsel %vm219, %v221, %v217
    %v223 = vmul.f32 %v198, %v222
    %v224 = vmin.f32 %v223, 1.0
    %v225 = vmax.f32 %v224, -1.0
    %v226 = vadd.f32 %v185, 1.0
    %v227 = vadd.f32 %v225, 1.0
    %v228 = vmul.f32 %v142, %v226
    %v229 = vmul.f32 %v143, %v227
    %v230 = vpack.c.bf16 %v229, %v228
    %v231 = vld [vmem:[#allocation4] sm:$0xf]
    %v232 = vld [vmem:[#allocation4 + $0x4] sm:$0xf]
    %v233 = vld [vmem:[#allocation4 + $0x8] sm:$0xf]
    %v234 = vld [vmem:[#allocation4 + $0xc] sm:$0xf]
    %v235 = vld [vmem:[#allocation4 + $0x10] sm:$0xf]
    %v236 = vld [vmem:[#allocation4 + $0x14] sm:$0xf]
    %v237 = vld [vmem:[#allocation4 + $0x18] sm:$0xf]
    %v238 = vld [vmem:[#allocation4 + $0x1c] sm:$0xf]
    %v239 = vld [vmem:[#allocation4 + $0x20] sm:$0xf]
    %v240 = vld [vmem:[#allocation4 + $0x24] sm:$0xf]
    %v241 = vld [vmem:[#allocation4 + $0x28] sm:$0xf]
    %v242 = vld [vmem:[#allocation4 + $0x2c] sm:$0xf]
    %v243 = vld [vmem:[#allocation4 + $0x30] sm:$0xf]
    %v244 = vld [vmem:[#allocation4 + $0x34] sm:$0xf]
    %v245 = vld [vmem:[#allocation4 + $0x38] sm:$0xf]
    %v246 = vld [vmem:[#allocation4 + $0x3c] sm:$0xf]
    %v247 = vld [vmem:[%s4] sm:$0x1]
    %v249 = vperm.slane %v247, 0
    %v267 = vunpack.c.l.b16 %v231
    %v268 = vunpack.c.l.b16 %v232
    %v269 = vunpack.c.l.b16 %v233
    %v270 = vunpack.c.l.b16 %v234
    %v271 = vunpack.c.l.b16 %v235
    %v272 = vunpack.c.l.b16 %v236
    %v273 = vunpack.c.l.b16 %v237
    %v274 = vunpack.c.l.b16 %v238
    %v275 = vunpack.c.l.b16 %v239
    %v276 = vunpack.c.l.b16 %v240
    %v277 = vunpack.c.l.b16 %v241
    %v278 = vunpack.c.l.b16 %v242
    %v279 = vunpack.c.l.b16 %v243
    %v280 = vunpack.c.l.b16 %v244
    %v281 = vunpack.c.l.b16 %v245
    %v282 = vunpack.c.l.b16 %v246
    %v283 = vpack.c.b16 %v268, %v267
    %v284 = vpack.c.b16 %v270, %v269
    %v285 = vpack.c.b16 %v272, %v271
    %v286 = vpack.c.b16 %v274, %v273
    %v287 = vpack.c.b16 %v276, %v275
    %v288 = vpack.c.b16 %v278, %v277
    %v289 = vpack.c.b16 %v280, %v279
    %v290 = vpack.c.b16 %v282, %v281
    %299 = vmatpush.bf16.msra.mxu0 %v290
    %300 = vmatpush.bf16.msra.mxu0 %v289
    %301 = vmatpush.bf16.msra.mxu0 %v288
    %302 = vmatpush.bf16.msra.mxu0 %v287
    %303 = vmatpush.bf16.msra.mxu0 %v286
    %304 = vmatpush.bf16.msra.mxu0 %v285
    %305 = vmatpush.bf16.msra.mxu0 %v284
    %306 = vmatpush.bf16.msra.mxu0 %v283
    %307 = vmatmul.bf16.gmra.mxu0 %v230
    %v308 = vpop.f32.mrf.mxu0
    %v309 = vadd.f32 %v249, %v308
    %v310 = vpop.f32.mrf.mxu0
    %v311 = vadd.f32 %v249, %v310
    %312 = vdwg.mxu0
    %313 = vst [vmem:[%s5] sm:$0xff] %v309
    %314 = vst [vmem:[%s5 + $0x8] sm:$0xff] %v311
    // Predicated region
    $region30: #{feed_forward.1} parent=1 // pred_check
      _
    $region31: #{feed_forward.1} parent=1 // pred_check_branch
      %316 = sbr.rel (0) target = $region33
    $region32: #{feed_forward.1} parent=1 // pred_region
      _
    $region33: #{feed_forward.1} parent=1 // pred_fallthru
      _
    // Predicated region
    $region34: #{feed_forward.1} parent=1 // pred_check
      _
    $region35: #{feed_forward.1} parent=1 // pred_check_branch
      %318 = sbr.rel (0) target = $region37
    $region36: #{feed_forward.1} parent=1 // pred_region
      _
    $region37: #{feed_forward.1} parent=1 // pred_fallthru
      _
    %319 = vsyncpa [#allocation3], 1
    %320 = vsyncpa [#allocation5], 1

</llo_original>
